<compile_context>
chip_gen: v7x
topology: tpu7x:2x2x1
jax: 0.10.0
libtpu: 0.0.40
codegen_flags: <defaults>
</compile_context>

<pallas_src>
import jax
import jax.numpy as jnp
from jax import lax
from jax.experimental import pallas as pl
from jax.experimental.pallas import tpu as pltpu

BN_EPS = 1e-5
L2_EPS = 1e-12  # F.normalize default eps

_M_TILES = (512, 256, 128, 64, 32, 16, 8)


# ----------------------------------------------------------------------------
# helpers
# ----------------------------------------------------------------------------
def _pick_tile(dim, candidates):
    """Largest candidate tile that divides `dim`, else the full dim."""
    for c in candidates:
        if dim % c == 0:
            return c
    return dim
    # TODO(synk): arbitrary (prime-ish) batch sizes fall back to tm=N; pad the
    # batch or add a ragged tail path if that must be supported at large N.


def _vmem_limit_bytes():
    """Scoped-VMEM limit: leave ~8 MiB headroom below physical capacity."""
    try:
        cap = pltpu.get_tpu_info().vmem_capacity_bytes
    except Exception:
        cap = 64 * 1024 * 1024  # conservative (v7x per-TC) fallback
    return int(min(cap - 8 * 1024 * 1024, 112 * 1024 * 1024))


def _compiler_params():
    return pltpu.CompilerParams(
        dimension_semantics=("parallel",),          # batch tiles -> megacore
        vmem_limit_bytes=_vmem_limit_bytes(),
    )


def _col_stats(h):
    """Per-tile column sum and sum-of-squares, packed as (1, 2, H) f32."""
    col_sum = jnp.sum(h, axis=0, keepdims=True)      # (1, H)
    col_sq = jnp.sum(h * h, axis=0, keepdims=True)   # (1, H)
    return jnp.concatenate([col_sum, col_sq], axis=0)[None]   # (1, 2, H)


# ----------------------------------------------------------------------------
# Kernel 1: h = x @ W + b   (+ per-tile column stats of h)
# ----------------------------------------------------------------------------
def _linear_stats_kernel(x_ref, w_ref, b_ref, h_ref, stats_ref):
    x = x_ref[...].astype(jnp.bfloat16)              # in-kernel cast (free)
    h = jnp.dot(x, w_ref[...], preferred_element_type=jnp.float32) + b_ref[...]
    h_ref[...] = h.astype(h_ref.dtype)
    stats_ref[...] = _col_stats(h)


def _linear_with_stats(x, w, b, *, out_dtype=jnp.bfloat16):
    n, kdim = x.shape
    hdim = w.shape[1]
    tm = _pick_tile(n, _M_TILES)
    grid = (n // tm,)

    return pl.pallas_call(
        _linear_stats_kernel,
        grid=grid,
        in_specs=[
            pl.BlockSpec((tm, kdim), lambda i: (i, 0)),     # x tile (f32)
            pl.BlockSpec((kdim, hdim), lambda i: (0, 0)),   # W resident (bf16)
            pl.BlockSpec((1, hdim), lambda i: (0, 0)),      # b (f32)
        ],
        out_specs=[
            pl.BlockSpec((tm, hdim), lambda i: (i, 0)),         # h
            pl.BlockSpec((1, 2, hdim), lambda i: (i, 0, 0)),    # col stats
        ],
        out_shape=[
            jax.ShapeDtypeStruct((n, hdim), out_dtype),
            jax.ShapeDtypeStruct((grid[0], 2, hdim), jnp.float32),
        ],
        compiler_params=_compiler_params(),
    )(x, w, b)


# ----------------------------------------------------------------------------
# Kernel 2: h_out = relu(h*scale + shift) @ W + b   (+ per-tile column stats)
# ----------------------------------------------------------------------------
def _bn_relu_linear_stats_kernel(h_ref, sc_ref, sh_ref, w_ref, b_ref,
                                 o_ref, stats_ref):
    a = h_ref[...].astype(jnp.float32) * sc_ref[...] + sh_ref[...]   # BN (f32)
    a = jnp.maximum(a, 0.0).astype(w_ref.dtype)                      # ReLU->bf16
    h = jnp.dot(a, w_ref[...], preferred_element_type=jnp.float32) + b_ref[...]
    o_ref[...] = h.astype(o_ref.dtype)
    stats_ref[...] = _col_stats(h)


def _bn_relu_linear_with_stats(h, scale, shift, w, b, *, out_dtype=jnp.bfloat16):
    n, kdim = h.shape
    hdim = w.shape[1]
    tm = _pick_tile(n, _M_TILES)
    grid = (n // tm,)

    return pl.pallas_call(
        _bn_relu_linear_stats_kernel,
        grid=grid,
        in_specs=[
            pl.BlockSpec((tm, kdim), lambda i: (i, 0)),     # h (prev layer)
            pl.BlockSpec((1, kdim), lambda i: (0, 0)),      # BN scale
            pl.BlockSpec((1, kdim), lambda i: (0, 0)),      # BN shift
            pl.BlockSpec((kdim, hdim), lambda i: (0, 0)),   # W resident
            pl.BlockSpec((1, hdim), lambda i: (0, 0)),      # b
        ],
        out_specs=[
            pl.BlockSpec((tm, hdim), lambda i: (i, 0)),
            pl.BlockSpec((1, 2, hdim), lambda i: (i, 0, 0)),
        ],
        out_shape=[
            jax.ShapeDtypeStruct((n, hdim), out_dtype),
            jax.ShapeDtypeStruct((grid[0], 2, hdim), jnp.float32),
        ],
        compiler_params=_compiler_params(),
    )(h, scale, shift, w, b)


# ----------------------------------------------------------------------------
# Kernel 3: out = l2norm(relu(h*scale + shift) @ W + b)
# ----------------------------------------------------------------------------
def _bn_relu_linear_norm_kernel(h_ref, sc_ref, sh_ref, w_ref, b_ref, o_ref):
    a = h_ref[...].astype(jnp.float32) * sc_ref[...] + sh_ref[...]
    a = jnp.maximum(a, 0.0).astype(w_ref.dtype)
    out = jnp.dot(a, w_ref[...], preferred_element_type=jnp.float32) + b_ref[...]
    ssq = jnp.sum(out * out, axis=1, keepdims=True)
    inv = lax.rsqrt(jnp.maximum(ssq, L2_EPS * L2_EPS))       # EUP rsqrt + mul
    o_ref[...] = (out * inv).astype(o_ref.dtype)


def _bn_relu_linear_norm(h, scale, shift, w, b, *, out_dtype=jnp.float32):
    n, kdim = h.shape
    odim = w.shape[1]
    tm = _pick_tile(n, _M_TILES)
    grid = (n // tm,)

    return pl.pallas_call(
        _bn_relu_linear_norm_kernel,
        grid=grid,
        in_specs=[
            pl.BlockSpec((tm, kdim), lambda i: (i, 0)),
            pl.BlockSpec((1, kdim), lambda i: (0, 0)),
            pl.BlockSpec((1, kdim), lambda i: (0, 0)),
            pl.BlockSpec((kdim, odim), lambda i: (0, 0)),   # W3 resident (tiny)
            pl.BlockSpec((1, odim), lambda i: (0, 0)),
        ],
        out_specs=pl.BlockSpec((tm, odim), lambda i: (i, 0)),
        out_shape=jax.ShapeDtypeStruct((n, odim), out_dtype),
        compiler_params=_compiler_params(),
    )(h, scale, shift, w, b)


# ----------------------------------------------------------------------------
# Wrapper: full ProjectHead forward
# ----------------------------------------------------------------------------
def _bn_scale_shift(stats, n_rows, gamma, beta):
    """Fold training-mode BatchNorm into per-column scale/shift (f32, tiny)."""
    tot = jnp.sum(stats, axis=0)                         # (2, H)
    mean = tot[0:1, :] / n_rows                          # (1, H)
    var = jnp.maximum(tot[1:2, :] / n_rows - mean * mean, 0.0)   # biased var
    scale = gamma * lax.rsqrt(var + BN_EPS)
    shift = beta - mean * scale
    return scale, shift


def project_head(feat, params):
    """feat: (N, input_dim) float32.  params: dict of weights (see init)."""
    n = feat.shape[0]

    # Layer 1: Linear (+ BN stats of its output).  x cast bf16 inside kernel.
    h1, st1 = _linear_with_stats(feat, params["w1"], params["b1"])
    sc1, sh1 = _bn_scale_shift(st1, n, params["g1"], params["be1"])

    # Layer 2: BN1 + ReLU + Linear (+ BN stats of its output)
    h2, st2 = _bn_relu_linear_with_stats(h1, sc1, sh1, params["w2"], params["b2"])
    sc2, sh2 = _bn_scale_shift(st2, n, params["g2"], params["be2"])

    # Layer 3: BN2 + ReLU + Linear + row L2-normalize
    return _bn_relu_linear_norm(h2, sc2, sh2, params["w3"], params["b3"])
    # TODO(synk): eval-mode BatchNorm (running stats) would simply replace the
    # batch-stat scale/shift inputs; training-mode batch stats are implemented
    # to match the reference module's default forward.


# ----------------------------------------------------------------------------
# Parameter init + pure-JAX reference
# ----------------------------------------------------------------------------
def init_params(key, input_dim, hidden_dim, out_dim):
    ks = jax.random.split(key, 6)
    scale1 = 1.0 / jnp.sqrt(input_dim)
    scale2 = 1.0 / jnp.sqrt(hidden_dim)

    def u(k, shape, s):
        return jax.random.uniform(k, shape, jnp.float32, -s, s)

    return {
        # Linear weights stored (in, out) == PyTorch weight.T, bf16 once here
        # (no per-forward cast ops under jit).
        "w1": u(ks[0], (input_dim, hidden_dim), scale1).astype(jnp.bfloat16),
        "b1": u(ks[1], (1, hidden_dim), scale1),
        "g1": jnp.ones((1, hidden_dim), jnp.float32),
        "be1": jnp.zeros((1, hidden_dim), jnp.float32),
        "w2": u(ks[2], (hidden_dim, hidden_dim), scale2).astype(jnp.bfloat16),
        "b2": u(ks[3], (1, hidden_dim), scale2),
        "g2": jnp.ones((1, hidden_dim), jnp.float32),
        "be2": jnp.zeros((1, hidden_dim), jnp.float32),
        "w3": u(ks[4], (hidden_dim, out_dim), scale2).astype(jnp.bfloat16),
        "b3": u(ks[5], (1, out_dim), scale2),
    }


def project_head_ref(feat, p):
    """Pure-JAX f32 reference (same bf16-stored weights, f32 math)."""
    w1 = p["w1"].astype(jnp.float32)
    w2 = p["w2"].astype(jnp.float32)
    w3 = p["w3"].astype(jnp.float32)
    h = feat @ w1 + p["b1"]
    m, v = jnp.mean(h, 0, keepdims=True), jnp.var(h, 0, keepdims=True)
    h = jnp.maximum((h - m) * lax.rsqrt(v + BN_EPS) * p["g1"] + p["be1"], 0.0)
    h = h @ w2 + p["b2"]
    m, v = jnp.mean(h, 0, keepdims=True), jnp.var(h, 0, keepdims=True)
    h = jnp.maximum((h - m) * lax.rsqrt(v + BN_EPS) * p["g2"] + p["be2"], 0.0)
    o = h @ w3 + p["b3"]
    return o / jnp.maximum(
        jnp.sqrt(jnp.sum(o * o, axis=1, keepdims=True)), L2_EPS)


if __name__ == "__main__":
    # Small shapes consistent with the module (scaled down from 2816/2048/128),
    # TPU-tile friendly.
    N, INPUT_DIM, HIDDEN_DIM, OUT_DIM = 8, 256, 128, 128

    key = jax.random.PRNGKey(0)
    k_x, k_p = jax.random.split(key)
    feat = jax.random.normal(k_x, (N, INPUT_DIM), jnp.float32)
    params = init_params(k_p, INPUT_DIM, HIDDEN_DIM, OUT_DIM)

    fwd = jax.jit(project_head)
    out = jax.block_until_ready(fwd(feat, params))

    ref = project_head_ref(feat, params)
    assert out.shape == (N, OUT_DIM)
    assert out.dtype == jnp.float32
    # bf16 MXU operands / bf16 intermediate h with f32 accumulation, f32 BN &
    # normalize: tolerance loosened accordingly.
    assert jnp.allclose(out, ref, atol=3e-2, rtol=3e-2), \
        float(jnp.max(jnp.abs(out - ref)))
    # Rows should be unit-norm (normalization itself is exact f32).
    assert jnp.allclose(jnp.linalg.norm(out, axis=1), 1.0, atol=1e-3)

    print("KERNEL_OK")
</pallas_src>

<mosaic_0001>
module attributes {stable_mosaic.version = 11 : i64} {
  func.func @_linear_stats_kernel(%arg0: i32, %arg1: memref<8x256xf32, #tpu.memory_space<vmem>>, %arg2: memref<256x128xbf16, #tpu.memory_space<vmem>>, %arg3: memref<1x128xf32, #tpu.memory_space<vmem>>, %arg4: memref<8x128xbf16, #tpu.memory_space<vmem>>, %arg5: memref<1x2x128xf32, #tpu.memory_space<vmem>>) attributes {dimension_semantics = [#tpu.dimension_semantics<parallel>], iteration_bounds = array<i64: 1>, scalar_prefetch = 0 : i64, scratch_operands = 0 : i64, tpu.core_type = #tpu.core_type<tc>, window_params = [{transform_indices = @transform_0, window_bounds = array<i64: 8, 256>}, {pipeline_mode = #tpu.pipeline_mode<synchronous>, transform_indices = @transform_1, window_bounds = array<i64: 256, 128>}, {pipeline_mode = #tpu.pipeline_mode<synchronous>, transform_indices = @transform_2, window_bounds = array<i64: 1, 128>}, {transform_indices = @transform_3, window_bounds = array<i64: 8, 128>}, {transform_indices = @transform_4, window_bounds = array<i64: 1, 2, 128>}]} {
    %c0 = arith.constant 0 : index
    %c0_0 = arith.constant 0 : index
    %0 = vector.load %arg1[%c0, %c0_0] : memref<8x256xf32, #tpu.memory_space<vmem>>, vector<8x256xf32>
    %1 = arith.truncf %0 : vector<8x256xf32> to vector<8x256xbf16>
    %c0_1 = arith.constant 0 : index
    %c0_2 = arith.constant 0 : index
    %2 = vector.load %arg2[%c0_1, %c0_2] : memref<256x128xbf16, #tpu.memory_space<vmem>>, vector<256x128xbf16>
    %cst = arith.constant dense<0.000000e+00> : vector<8x128xf32>
    %3 = tpu.matmul %1, %2, %cst {dimension_numbers = #tpu.dot_dimension_numbers<[1], [0], [0], [1], [0, 0, 1, 1], [], []>} : vector<8x256xbf16>, vector<256x128xbf16>, vector<8x128xf32> -> vector<8x128xf32>
    %c0_3 = arith.constant 0 : index
    %c0_4 = arith.constant 0 : index
    %4 = vector.load %arg3[%c0_3, %c0_4] : memref<1x128xf32, #tpu.memory_space<vmem>>, vector<1x128xf32>
    %5 = vector.broadcast %4 : vector<1x128xf32> to vector<8x128xf32>
    %6 = arith.addf %3, %5 : vector<8x128xf32>
    %7 = arith.truncf %6 : vector<8x128xf32> to vector<8x128xbf16>
    %c0_5 = arith.constant 0 : index
    %c0_6 = arith.constant 0 : index
    %8 = vector.load %arg4[%c0_5, %c0_6] : memref<8x128xbf16, #tpu.memory_space<vmem>>, vector<8x128xbf16>
    tpu.vector_store %arg4[%c0_5, %c0_6], %7 {strides = array<i32>} : memref<8x128xbf16, #tpu.memory_space<vmem>>, vector<8x128xbf16>,
    %cst_7 = arith.constant dense<0.000000e+00> : vector<128xf32>
    %9 = vector.multi_reduction <add>, %6, %cst_7 [0] : vector<8x128xf32> to vector<128xf32>
    %10 = vector.shape_cast %9 : vector<128xf32> to vector<1x128xf32>
    %11 = arith.mulf %6, %6 : vector<8x128xf32>
    %cst_8 = arith.constant dense<0.000000e+00> : vector<128xf32>
    %12 = vector.multi_reduction <add>, %11, %cst_8 [0] : vector<8x128xf32> to vector<128xf32>
    %13 = vector.shape_cast %12 : vector<128xf32> to vector<1x128xf32>
    %14 = tpu.concatenate %10, %13 in 0 : vector<1x128xf32>, vector<1x128xf32> -> vector<2x128xf32>
    %15 = vector.shape_cast %14 : vector<2x128xf32> to vector<1x2x128xf32>
    %c0_9 = arith.constant 0 : index
    %c0_10 = arith.constant 0 : index
    %c0_11 = arith.constant 0 : index
    %16 = vector.load %arg5[%c0_9, %c0_10, %c0_11] : memref<1x2x128xf32, #tpu.memory_space<vmem>>, vector<1x2x128xf32>
    tpu.vector_store %arg5[%c0_9, %c0_10, %c0_11], %15 {strides = array<i32>} : memref<1x2x128xf32, #tpu.memory_space<vmem>>, vector<1x2x128xf32>,
    return
  }
  func.func @transform_0(%arg0: i32) -> (i32, i32) {
    %c0_i32 = arith.constant 0 : i32
    %c0_i32_0 = arith.constant 0 : i32
    return %arg0, %c0_i32 : i32, i32
  }
  func.func @transform_1(%arg0: i32) -> (i32, i32) {
    %c0_i32 = arith.constant 0 : i32
    %c0_i32_0 = arith.constant 0 : i32
    %c0_i32_1 = arith.constant 0 : i32
    return %c0_i32, %c0_i32_0 : i32, i32
  }
  func.func @transform_2(%arg0: i32) -> (i32, i32) {
    %c0_i32 = arith.constant 0 : i32
    %c0_i32_0 = arith.constant 0 : i32
    %c0_i32_1 = arith.constant 0 : i32
    return %c0_i32, %c0_i32_0 : i32, i32
  }
  func.func @transform_3(%arg0: i32) -> (i32, i32) {
    %c0_i32 = arith.constant 0 : i32
    %c0_i32_0 = arith.constant 0 : i32
    return %arg0, %c0_i32 : i32, i32
  }
  func.func @transform_4(%arg0: i32) -> (i32, i32, i32) {
    %c0_i32 = arith.constant 0 : i32
    %c0_i32_0 = arith.constant 0 : i32
    %c0_i32_1 = arith.constant 0 : i32
    return %arg0, %c0_i32, %c0_i32_0 : i32, i32, i32
  }
}

module attributes {stable_mosaic.version = 11 : i64} {
  func.func @_bn_relu_linear_norm_kernel(%arg0: i32, %arg1: memref<8x128xbf16, #tpu.memory_space<vmem>>, %arg2: memref<1x128xf32, #tpu.memory_space<vmem>>, %arg3: memref<1x128xf32, #tpu.memory_space<vmem>>, %arg4: memref<128x128xbf16, #tpu.memory_space<vmem>>, %arg5: memref<1x128xf32, #tpu.memory_space<vmem>>, %arg6: memref<8x128xf32, #tpu.memory_space<vmem>>) attributes {dimension_semantics = [#tpu.dimension_semantics<parallel>], iteration_bounds = array<i64: 1>, scalar_prefetch = 0 : i64, scratch_operands = 0 : i64, tpu.core_type = #tpu.core_type<tc>, window_params = [{transform_indices = @transform_0, window_bounds = array<i64: 8, 128>}, {pipeline_mode = #tpu.pipeline_mode<synchronous>, transform_indices = @transform_1, window_bounds = array<i64: 1, 128>}, {pipeline_mode = #tpu.pipeline_mode<synchronous>, transform_indices = @transform_2, window_bounds = array<i64: 1, 128>}, {pipeline_mode = #tpu.pipeline_mode<synchronous>, transform_indices = @transform_3, window_bounds = array<i64: 128, 128>}, {pipeline_mode = #tpu.pipeline_mode<synchronous>, transform_indices = @transform_4, window_bounds = array<i64: 1, 128>}, {transform_indices = @transform_5, window_bounds = array<i64: 8, 128>}]} {
    %c0 = arith.constant 0 : index
    %c0_0 = arith.constant 0 : index
    %0 = vector.load %arg1[%c0, %c0_0] : memref<8x128xbf16, #tpu.memory_space<vmem>>, vector<8x128xbf16>
    %1 = arith.extf %0 : vector<8x128xbf16> to vector<8x128xf32>
    %c0_1 = arith.constant 0 : index
    %c0_2 = arith.constant 0 : index
    %2 = vector.load %arg2[%c0_1, %c0_2] : memref<1x128xf32, #tpu.memory_space<vmem>>, vector<1x128xf32>
    %3 = vector.broadcast %2 : vector<1x128xf32> to vector<8x128xf32>
    %4 = arith.mulf %1, %3 : vector<8x128xf32>
    %c0_3 = arith.constant 0 : index
    %c0_4 = arith.constant 0 : index
    %5 = vector.load %arg3[%c0_3, %c0_4] : memref<1x128xf32, #tpu.memory_space<vmem>>, vector<1x128xf32>
    %6 = vector.broadcast %5 : vector<1x128xf32> to vector<8x128xf32>
    %7 = arith.addf %4, %6 : vector<8x128xf32>
    %cst = arith.constant 0.000000e+00 : f32
    %8 = vector.broadcast %cst : f32 to vector<8x128xf32>
    %9 = arith.maximumf %7, %8 : vector<8x128xf32>
    %10 = arith.truncf %9 : vector<8x128xf32> to vector<8x128xbf16>
    %c0_5 = arith.constant 0 : index
    %c0_6 = arith.constant 0 : index
    %11 = vector.load %arg4[%c0_5, %c0_6] : memref<128x128xbf16, #tpu.memory_space<vmem>>, vector<128x128xbf16>
    %cst_7 = arith.constant dense<0.000000e+00> : vector<8x128xf32>
    %12 = tpu.matmul %10, %11, %cst_7 {dimension_numbers = #tpu.dot_dimension_numbers<[1], [0], [0], [1], [0, 0, 1, 1], [], []>} : vector<8x128xbf16>, vector<128x128xbf16>, vector<8x128xf32> -> vector<8x128xf32>
    %c0_8 = arith.constant 0 : index
    %c0_9 = arith.constant 0 : index
    %13 = vector.load %arg5[%c0_8, %c0_9] : memref<1x128xf32, #tpu.memory_space<vmem>>, vector<1x128xf32>
    %14 = vector.broadcast %13 : vector<1x128xf32> to vector<8x128xf32>
    %15 = arith.addf %12, %14 : vector<8x128xf32>
    %16 = arith.mulf %15, %15 : vector<8x128xf32>
    %cst_10 = arith.constant dense<0.000000e+00> : vector<8xf32>
    %17 = vector.multi_reduction <add>, %16, %cst_10 [1] : vector<8x128xf32> to vector<8xf32>
    %18 = vector.shape_cast %17 : vector<8xf32> to vector<8x1xf32>
    %cst_11 = arith.constant 1.000000e-24 : f32
    %19 = vector.broadcast %cst_11 : f32 to vector<8x1xf32>
    %20 = arith.maximumf %18, %19 : vector<8x1xf32>
    %21 = math.rsqrt %20 : vector<8x1xf32>
    %22 = vector.broadcast %21 : vector<8x1xf32> to vector<8x128xf32>
    %23 = arith.mulf %15, %22 : vector<8x128xf32>
    %c0_12 = arith.constant 0 : index
    %c0_13 = arith.constant 0 : index
    %24 = vector.load %arg6[%c0_12, %c0_13] : memref<8x128xf32, #tpu.memory_space<vmem>>, vector<8x128xf32>
    tpu.vector_store %arg6[%c0_12, %c0_13], %23 {strides = array<i32>} : memref<8x128xf32, #tpu.memory_space<vmem>>, vector<8x128xf32>,
    return
  }
  func.func @transform_0(%arg0: i32) -> (i32, i32) {
    %c0_i32 = arith.constant 0 : i32
    %c0_i32_0 = arith.constant 0 : i32
    return %arg0, %c0_i32 : i32, i32
  }
  func.func @transform_1(%arg0: i32) -> (i32, i32) {
    %c0_i32 = arith.constant 0 : i32
    %c0_i32_0 = arith.constant 0 : i32
    %c0_i32_1 = arith.constant 0 : i32
    return %c0_i32, %c0_i32_0 : i32, i32
  }
  func.func @transform_2(%arg0: i32) -> (i32, i32) {
    %c0_i32 = arith.constant 0 : i32
    %c0_i32_0 = arith.constant 0 : i32
    %c0_i32_1 = arith.constant 0 : i32
    return %c0_i32, %c0_i32_0 : i32, i32
  }
  func.func @transform_3(%arg0: i32) -> (i32, i32) {
    %c0_i32 = arith.constant 0 : i32
    %c0_i32_0 = arith.constant 0 : i32
    %c0_i32_1 = arith.constant 0 : i32
    return %c0_i32, %c0_i32_0 : i32, i32
  }
  func.func @transform_4(%arg0: i32) -> (i32, i32) {
    %c0_i32 = arith.constant 0 : i32
    %c0_i32_0 = arith.constant 0 : i32
    %c0_i32_1 = arith.constant 0 : i32
    return %c0_i32, %c0_i32_0 : i32, i32
  }
  func.func @transform_5(%arg0: i32) -> (i32, i32) {
    %c0_i32 = arith.constant 0 : i32
    %c0_i32_0 = arith.constant 0 : i32
    return %arg0, %c0_i32 : i32, i32
  }
}

module attributes {stable_mosaic.version = 11 : i64} {
  func.func @_bn_relu_linear_stats_kernel(%arg0: i32, %arg1: memref<8x128xbf16, #tpu.memory_space<vmem>>, %arg2: memref<1x128xf32, #tpu.memory_space<vmem>>, %arg3: memref<1x128xf32, #tpu.memory_space<vmem>>, %arg4: memref<128x128xbf16, #tpu.memory_space<vmem>>, %arg5: memref<1x128xf32, #tpu.memory_space<vmem>>, %arg6: memref<8x128xbf16, #tpu.memory_space<vmem>>, %arg7: memref<1x2x128xf32, #tpu.memory_space<vmem>>) attributes {dimension_semantics = [#tpu.dimension_semantics<parallel>], iteration_bounds = array<i64: 1>, scalar_prefetch = 0 : i64, scratch_operands = 0 : i64, tpu.core_type = #tpu.core_type<tc>, window_params = [{transform_indices = @transform_0, window_bounds = array<i64: 8, 128>}, {pipeline_mode = #tpu.pipeline_mode<synchronous>, transform_indices = @transform_1, window_bounds = array<i64: 1, 128>}, {pipeline_mode = #tpu.pipeline_mode<synchronous>, transform_indices = @transform_2, window_bounds = array<i64: 1, 128>}, {pipeline_mode = #tpu.pipeline_mode<synchronous>, transform_indices = @transform_3, window_bounds = array<i64: 128, 128>}, {pipeline_mode = #tpu.pipeline_mode<synchronous>, transform_indices = @transform_4, window_bounds = array<i64: 1, 128>}, {transform_indices = @transform_5, window_bounds = array<i64: 8, 128>}, {transform_indices = @transform_6, window_bounds = array<i64: 1, 2, 128>}]} {
    %c0 = arith.constant 0 : index
    %c0_0 = arith.constant 0 : index
    %0 = vector.load %arg1[%c0, %c0_0] : memref<8x128xbf16, #tpu.memory_space<vmem>>, vector<8x128xbf16>
    %1 = arith.extf %0 : vector<8x128xbf16> to vector<8x128xf32>
    %c0_1 = arith.constant 0 : index
    %c0_2 = arith.constant 0 : index
    %2 = vector.load %arg2[%c0_1, %c0_2] : memref<1x128xf32, #tpu.memory_space<vmem>>, vector<1x128xf32>
    %3 = vector.broadcast %2 : vector<1x128xf32> to vector<8x128xf32>
    %4 = arith.mulf %1, %3 : vector<8x128xf32>
    %c0_3 = arith.constant 0 : index
    %c0_4 = arith.constant 0 : index
    %5 = vector.load %arg3[%c0_3, %c0_4] : memref<1x128xf32, #tpu.memory_space<vmem>>, vector<1x128xf32>
    %6 = vector.broadcast %5 : vector<1x128xf32> to vector<8x128xf32>
    %7 = arith.addf %4, %6 : vector<8x128xf32>
    %cst = arith.constant 0.000000e+00 : f32
    %8 = vector.broadcast %cst : f32 to vector<8x128xf32>
    %9 = arith.maximumf %7, %8 : vector<8x128xf32>
    %10 = arith.truncf %9 : vector<8x128xf32> to vector<8x128xbf16>
    %c0_5 = arith.constant 0 : index
    %c0_6 = arith.constant 0 : index
    %11 = vector.load %arg4[%c0_5, %c0_6] : memref<128x128xbf16, #tpu.memory_space<vmem>>, vector<128x128xbf16>
    %cst_7 = arith.constant dense<0.000000e+00> : vector<8x128xf32>
    %12 = tpu.matmul %10, %11, %cst_7 {dimension_numbers = #tpu.dot_dimension_numbers<[1], [0], [0], [1], [0, 0, 1, 1], [], []>} : vector<8x128xbf16>, vector<128x128xbf16>, vector<8x128xf32> -> vector<8x128xf32>
    %c0_8 = arith.constant 0 : index
    %c0_9 = arith.constant 0 : index
    %13 = vector.load %arg5[%c0_8, %c0_9] : memref<1x128xf32, #tpu.memory_space<vmem>>, vector<1x128xf32>
    %14 = vector.broadcast %13 : vector<1x128xf32> to vector<8x128xf32>
    %15 = arith.addf %12, %14 : vector<8x128xf32>
    %16 = arith.truncf %15 : vector<8x128xf32> to vector<8x128xbf16>
    %c0_10 = arith.constant 0 : index
    %c0_11 = arith.constant 0 : index
    %17 = vector.load %arg6[%c0_10, %c0_11] : memref<8x128xbf16, #tpu.memory_space<vmem>>, vector<8x128xbf16>
    tpu.vector_store %arg6[%c0_10, %c0_11], %16 {strides = array<i32>} : memref<8x128xbf16, #tpu.memory_space<vmem>>, vector<8x128xbf16>,
    %cst_12 = arith.constant dense<0.000000e+00> : vector<128xf32>
    %18 = vector.multi_reduction <add>, %15, %cst_12 [0] : vector<8x128xf32> to vector<128xf32>
    %19 = vector.shape_cast %18 : vector<128xf32> to vector<1x128xf32>
    %20 = arith.mulf %15, %15 : vector<8x128xf32>
    %cst_13 = arith.constant dense<0.000000e+00> : vector<128xf32>
    %21 = vector.multi_reduction <add>, %20, %cst_13 [0] : vector<8x128xf32> to vector<128xf32>
    %22 = vector.shape_cast %21 : vector<128xf32> to vector<1x128xf32>
    %23 = tpu.concatenate %19, %22 in 0 : vector<1x128xf32>, vector<1x128xf32> -> vector<2x128xf32>
    %24 = vector.shape_cast %23 : vector<2x128xf32> to vector<1x2x128xf32>
    %c0_14 = arith.constant 0 : index
    %c0_15 = arith.constant 0 : index
    %c0_16 = arith.constant 0 : index
    %25 = vector.load %arg7[%c0_14, %c0_15, %c0_16] : memref<1x2x128xf32, #tpu.memory_space<vmem>>, vector<1x2x128xf32>
    tpu.vector_store %arg7[%c0_14, %c0_15, %c0_16], %24 {strides = array<i32>} : memref<1x2x128xf32, #tpu.memory_space<vmem>>, vector<1x2x128xf32>,
    return
  }
  func.func @transform_0(%arg0: i32) -> (i32, i32) {
    %c0_i32 = arith.constant 0 : i32
    %c0_i32_0 = arith.constant 0 : i32
    return %arg0, %c0_i32 : i32, i32
  }
  func.func @transform_1(%arg0: i32) -> (i32, i32) {
    %c0_i32 = arith.constant 0 : i32
    %c0_i32_0 = arith.constant 0 : i32
    %c0_i32_1 = arith.constant 0 : i32
    return %c0_i32, %c0_i32_0 : i32, i32
  }
  func.func @transform_2(%arg0: i32) -> (i32, i32) {
    %c0_i32 = arith.constant 0 : i32
    %c0_i32_0 = arith.constant 0 : i32
    %c0_i32_1 = arith.constant 0 : i32
    return %c0_i32, %c0_i32_0 : i32, i32
  }
  func.func @transform_3(%arg0: i32) -> (i32, i32) {
    %c0_i32 = arith.constant 0 : i32
    %c0_i32_0 = arith.constant 0 : i32
    %c0_i32_1 = arith.constant 0 : i32
    return %c0_i32, %c0_i32_0 : i32, i32
  }
  func.func @transform_4(%arg0: i32) -> (i32, i32) {
    %c0_i32 = arith.constant 0 : i32
    %c0_i32_0 = arith.constant 0 : i32
    %c0_i32_1 = arith.constant 0 : i32
    return %c0_i32, %c0_i32_0 : i32, i32
  }
  func.func @transform_5(%arg0: i32) -> (i32, i32) {
    %c0_i32 = arith.constant 0 : i32
    %c0_i32_0 = arith.constant 0 : i32
    return %arg0, %c0_i32 : i32, i32
  }
  func.func @transform_6(%arg0: i32) -> (i32, i32, i32) {
    %c0_i32 = arith.constant 0 : i32
    %c0_i32_0 = arith.constant 0 : i32
    %c0_i32_1 = arith.constant 0 : i32
    return %arg0, %c0_i32, %c0_i32_0 : i32, i32, i32
  }
}

</mosaic_0001>

<llo_original>
// kernel: project_head.4
$region0: #{project_head.4}
  #allocation0 [shape = 'u32[]', space=smem, size = 0x4, offset = 0x4, fixed_abs, tag = 'smem constant byte address 0x4 - core index']
  #allocation1 [shape = 'u32[144,128]{1,0:T(1,128)}', space=vmem, size = 0x12000, scoped, tag = 'internal scratch']
  %s0 = inlined_call_operand.vmem [shape: bf16[8,128], index: 0, kind: input, shape index: {}]
  %s1 = inlined_call_operand.vmem [shape: f32[1,128], index: 1, kind: input, shape index: {}]
  %s2 = inlined_call_operand.vmem [shape: f32[1,128], index: 2, kind: input, shape index: {}]
  %s3 = inlined_call_operand.vmem [shape: bf16[128,128], index: 3, kind: input, shape index: {}]
  %s4 = inlined_call_operand.vmem [shape: f32[1,128], index: 4, kind: input, shape index: {}]
  %s5 = inlined_call_operand.vmem [shape: bf16[8,128], index: 5, kind: output, shape index: {0}]
  %s6 = inlined_call_operand.vmem [shape: f32[1,2,128], index: 6, kind: output, shape index: {1}]
  %7 = xla_tuple %s5, %s6
  %s8 = sld [smem:[#allocation0]]
  $region38: #{project_head.4} parent=0
    _
  %s10 = ssub.s32 1, %s8
  %s11 = scalar_select 0, %s10, %s8
  // Predicated region
  $region2: #{project_head.4} parent=0 // pred_check
    _
  $region3: #{project_head.4} parent=0 // pred_check_branch
    %13 = sbr.rel (0) target = $region5
  $region4: #{project_head.4} parent=0 // pred_region
    _
  $region5: #{project_head.4} parent=0 // pred_fallthru
    _
  // Predicated region
  $region6: #{project_head.4} parent=0 // pred_check
    _
  $region7: #{project_head.4} parent=0 // pred_check_branch
    %15 = sbr.rel (0) target = $region9
  $region8: #{project_head.4} parent=0 // pred_region
    _
  $region9: #{project_head.4} parent=0 // pred_fallthru
    _
  // Predicated region
  $region10: #{project_head.4} parent=0 // pred_check
    _
  $region11: #{project_head.4} parent=0 // pred_check_branch
    %17 = sbr.rel (0) target = $region13
  $region12: #{project_head.4} parent=0 // pred_region
    _
  $region13: #{project_head.4} parent=0 // pred_fallthru
    _
  // Predicated region
  $region14: #{project_head.4} parent=0 // pred_check
    _
  $region15: #{project_head.4} parent=0 // pred_check_branch
    %19 = sbr.rel (0) target = $region17
  $region16: #{project_head.4} parent=0 // pred_region
    _
  $region17: #{project_head.4} parent=0 // pred_fallthru
    _
  // Predicated region
  $region18: #{project_head.4} parent=0 // pred_check
    _
  $region19: #{project_head.4} parent=0 // pred_check_branch
    %21 = sbr.rel (0) target = $region21
  $region20: #{project_head.4} parent=0 // pred_region
    _
  $region21: #{project_head.4} parent=0 // pred_fallthru
    _
  %v23 = vld [vmem:[%s0] sm:$0xf]
  %v24 = vunpack.c.l.bf16 %v23
  %v25 = vld [vmem:[%s1] sm:$0x1]
  %v27 = vlaneseq
  %v28 = vshrl.u32 %v27, 7
  %v29 = vsub.s32 0, %v28
  %v30 = vrot.slane %v25, %v29
  %v32 = vmul.f32 %v24, %v30
  %v33 = vld [vmem:[%s2] sm:$0x1]
  %v35 = vlaneseq
  %v36 = vshrl.u32 %v35, 7
  %v37 = vsub.s32 0, %v36
  %v38 = vrot.slane %v33, %v37
  %v40 = vadd.f32 %v32, %v38
  %v41 = vmax.f32 %v40, 0.0
  %v42 = vpack.c.bf16 %v41, %v41
  %v43 = vld [vmem:[%s3] sm:$0xf]
  %v44 = vld [vmem:[%s3 + $0x4] sm:$0xf]
  %v45 = vld [vmem:[%s3 + $0x8] sm:$0xf]
  %v46 = vld [vmem:[%s3 + $0xc] sm:$0xf]
  %v47 = vld [vmem:[%s3 + $0x10] sm:$0xf]
  %v48 = vld [vmem:[%s3 + $0x14] sm:$0xf]
  %v49 = vld [vmem:[%s3 + $0x18] sm:$0xf]
  %v50 = vld [vmem:[%s3 + $0x1c] sm:$0xf]
  %v51 = vld [vmem:[%s3 + $0x20] sm:$0xf]
  %v52 = vld [vmem:[%s3 + $0x24] sm:$0xf]
  %v53 = vld [vmem:[%s3 + $0x28] sm:$0xf]
  %v54 = vld [vmem:[%s3 + $0x2c] sm:$0xf]
  %v55 = vld [vmem:[%s3 + $0x30] sm:$0xf]
  %v56 = vld [vmem:[%s3 + $0x34] sm:$0xf]
  %v57 = vld [vmem:[%s3 + $0x38] sm:$0xf]
  %v58 = vld [vmem:[%s3 + $0x3c] sm:$0xf]
  %v59 = vld [vmem:[%s4] sm:$0x1]
  %v61 = vlaneseq
  %v62 = vshrl.u32 %v61, 7
  %v63 = vsub.s32 0, %v62
  %v64 = vrot.slane %v59, %v63
  %v82 = vunpack.c.l.b16 %v43
  %v83 = vunpack.c.l.b16 %v44
  %v84 = vunpack.c.l.b16 %v45
  %v85 = vunpack.c.l.b16 %v46
  %v86 = vunpack.c.l.b16 %v47
  %v87 = vunpack.c.l.b16 %v48
  %v88 = vunpack.c.l.b16 %v49
  %v89 = vunpack.c.l.b16 %v50
  %v90 = vunpack.c.l.b16 %v51
  %v91 = vunpack.c.l.b16 %v52
  %v92 = vunpack.c.l.b16 %v53
  %v93 = vunpack.c.l.b16 %v54
  %v94 = vunpack.c.l.b16 %v55
  %v95 = vunpack.c.l.b16 %v56
  %v96 = vunpack.c.l.b16 %v57
  %v97 = vunpack.c.l.b16 %v58
  %v98 = vpack.c.b16 %v83, %v82
  %v99 = vpack.c.b16 %v85, %v84
  %v100 = vpack.c.b16 %v87, %v86
  %v101 = vpack.c.b16 %v89, %v88
  %v102 = vpack.c.b16 %v91, %v90
  %v103 = vpack.c.b16 %v93, %v92
  %v104 = vpack.c.b16 %v95, %v94
  %v105 = vpack.c.b16 %v97, %v96
  %114 = vmatprep.subr.bf16.mxu0 0
  %115 = vmatpush1.bf16.msra.mxu0 %v98
  %116 = vmatprep.subr.bf16.mxu0 0
  %117 = vmatpush1.bf16.msra.mxu0 %v99
  %118 = vmatprep.subr.bf16.mxu0 0
  %119 = vmatpush1.bf16.msra.mxu0 %v100
  %120 = vmatprep.subr.bf16.mxu0 0
  %121 = vmatpush1.bf16.msra.mxu0 %v101
  %122 = vmatprep.subr.bf16.mxu0 0
  %123 = vmatpush1.bf16.msra.mxu0 %v102
  %124 = vmatprep.subr.bf16.mxu0 0
  %125 = vmatpush1.bf16.msra.mxu0 %v103
  %126 = vmatprep.subr.bf16.mxu0 0
  %127 = vmatpush1.bf16.msra.mxu0 %v104
  %128 = vmatprep.subr.bf16.mxu0 0
  %129 = vmatpush1.bf16.msra.mxu0 %v105
  %130 = vmatprep.subr.bf16.mxu0 0
  %131 = vmatpush1.bf16.msra.mxu0 0
  %132 = vmatprep.subr.bf16.mxu0 0
  %133 = vmatpush1.bf16.msra.mxu0 0
  %134 = vmatprep.subr.bf16.mxu0 0
  %135 = vmatpush1.bf16.msra.mxu0 0
  %136 = vmatprep.subr.bf16.mxu0 0
  %137 = vmatpush1.bf16.msra.mxu0 0
  %138 = vmatprep.subr.bf16.mxu0 0
  %139 = vmatpush1.bf16.msra.mxu0 0
  %140 = vmatprep.subr.bf16.mxu0 0
  %141 = vmatpush1.bf16.msra.mxu0 0
  %142 = vmatprep.subr.bf16.mxu0 0
  %143 = vmatpush1.bf16.msra.mxu0 0
  %144 = vmatprep.subr.bf16.mxu0 0
  %145 = vmatpush1.bf16.msra.mxu0 0
  %146 = vmatprep.mubr.bf16.mxu0 0
  %147 = vmatmul.mubr.bf16.gmra.mrb[0].mxu0 %v42
  %v148 = vpop.f32.mrb[0].mxu0
  %v149 = vadd.f32 %v64, %v148
  %v150 = vpop.f32.mrb[0].mxu0
  %v151 = vpop.f32.mrb[0].mxu0
  %v152 = vpop.f32.mrb[0].mxu0
  %153 = vdwg.mxu0
  %v154 = vpack.c.bf16 %v149, %v149
  %155 = vst [vmem:[%s5] sm:$0xf] %v154
  %v156 = vrot.slane %v149, 4
  %v157 = vadd.f32 %v149, %v156
  %v158 = vrot.slane %v157, 2
  %v159 = vadd.f32 %v157, %v158
  %v160 = vrot.slane %v159, 1
  %v161 = vadd.f32 %v159, %v160
  %v162 = vmul.f32 %v149, %v149
  %v163 = vrot.slane %v162, 4
  %v164 = vadd.f32 %v162, %v163
  %v165 = vrot.slane %v164, 2
  %v166 = vadd.f32 %v164, %v165
  %v167 = vrot.slane %v166, 1
  %v168 = vadd.f32 %v166, %v167
  %vm169 = vcmask 1040384
  %v170 = vsel %vm169, %v161, %v168
  %171 = vst [vmem:[%s6] sm:$0x3] %v170
  // Predicated region
  $region22: #{project_head.4} parent=0 // pred_check
    _
  $region23: #{project_head.4} parent=0 // pred_check_branch
    %173 = sbr.rel (0) target = $region25
  $region24: #{project_head.4} parent=0 // pred_region
    _
  $region25: #{project_head.4} parent=0 // pred_fallthru
    _
  // Predicated region
  $region26: #{project_head.4} parent=0 // pred_check
    _
  $region27: #{project_head.4} parent=0 // pred_check_branch
    %175 = sbr.rel (0) target = $region29
  $region28: #{project_head.4} parent=0 // pred_region
    _
  $region29: #{project_head.4} parent=0 // pred_fallthru
    _
  // Predicated region
  $region30: #{project_head.4} parent=0 // pred_check
    _
  $region31: #{project_head.4} parent=0 // pred_check_branch
    %177 = sbr.rel (0) target = $region33
  $region32: #{project_head.4} parent=0 // pred_region
    _
  $region33: #{project_head.4} parent=0 // pred_fallthru
    _
  // Predicated region
  $region34: #{project_head.4} parent=0 // pred_check
    _
  $region35: #{project_head.4} parent=0 // pred_check_branch
    %179 = sbr.rel (0) target = $region37
  $region36: #{project_head.4} parent=0 // pred_region
    _
  $region37: #{project_head.4} parent=0 // pred_fallthru
    _

// kernel: project_head.3
$region0: #{project_head.3}
  #allocation0 [shape = 'u32[]', space=smem, size = 0x4, offset = 0x4, fixed_abs, tag = 'smem constant byte address 0x4 - core index']
  #allocation1 [shape = 'u32[144,128]{1,0:T(1,128)}', space=vmem, size = 0x12000, scoped, tag = 'internal scratch']
  %s0 = inlined_call_operand.hbm [shape: f32[8,256], index: 0, kind: input, shape index: {}]
  %s1 = inlined_call_operand.hbm [shape: bf16[256,128], index: 1, kind: input, shape index: {}]
  %s2 = inlined_call_operand.vmem [shape: f32[1,128], index: 2, kind: input, shape index: {}]
  %s3 = inlined_call_operand.vmem [shape: bf16[8,128], index: 3, kind: output, shape index: {0}]
  %s4 = inlined_call_operand.vmem [shape: f32[1,2,128], index: 4, kind: output, shape index: {1}]
  %5 = xla_tuple %s3, %s4
  %s6 = sld [smem:[#allocation0]]
  $region38: #{project_head.3} parent=0
    _
  %s8 = ssub.s32 1, %s6
  %s9 = scalar_select 0, %s8, %s6
  $region1: #{project_head.3} parent=0
    #allocation2 [shape = 'u8[8192]{0}', space=vmem, size = 0x2000, scoped, tag = 'input window, operand 0, single buffered']
    #allocation3 [shape = 's32[1]{0}', space=sflag, size = 0x4, scoped, tag = 'scoped memory for project_head.3']
    #allocation4 [shape = 'u8[65536]{0}', space=vmem, size = 0x10000, scoped, tag = 'input window, operand 1, single buffered']
    #allocation5 [shape = 's32[1]{0}', space=sflag, size = 0x4, scoped, tag = 'scoped memory for project_head.3']
    %10 = vsyncpa [#allocation3], 0
    %11 = vsyncpa [#allocation5], 0
    // Predicated region
    $region2: #{project_head.3} parent=1 // pred_check
      _
    $region3: #{project_head.3} parent=1 // pred_check_branch
      %13 = sbr.rel (0) target = $region5
    $region4: #{project_head.3} parent=1 // pred_region
      %s15 = ssub.s32 256, 256
      %16 = vsyncadd [#allocation3], %s15
      %s18 = sshll.u32 [#allocation2], 4
      %s19 = int_to_ptr.vmem [resolvable:$true] %s18
      %21 = dma.hbm_to_vmem [thread:$0]  %s0, 256, %s19, [#allocation3]
    $region5: #{project_head.3} parent=1 // pred_fallthru
      _
    // Predicated region
    $region6: #{project_head.3} parent=1 // pred_check
      _
    $region7: #{project_head.3} parent=1 // pred_check_branch
      %23 = sbr.rel (0) target = $region9
    $region8: #{project_head.3} parent=1 // pred_region
      %s25 = ssub.s32 2048, 2048
      %26 = vsyncadd [#allocation5], %s25
      %s27 = sshll.u32 [#allocation4], 4
      %s28 = int_to_ptr.vmem [resolvable:$true] %s27
      %33 = dma.hbm_to_vmem [thread:$0]  %s1, 2048, %s28, [#allocation5], 64, 64, 4
    $region9: #{project_head.3} parent=1 // pred_fallthru
      _
    // Predicated region
    $region10: #{project_head.3} parent=1 // pred_check
      _
    $region11: #{project_head.3} parent=1 // pred_check_branch
      %35 = sbr.rel (0) target = $region13
    $region12: #{project_head.3} parent=1 // pred_region
      _
    $region13: #{project_head.3} parent=1 // pred_fallthru
      _
    // Predicated region
    $region14: #{project_head.3} parent=1 // pred_check
      _
    $region15: #{project_head.3} parent=1 // pred_check_branch
      %37 = sbr.rel (0) target = $region17
    $region16: #{project_head.3} parent=1 // pred_region
      %38 = dma.done [#allocation3], 256
    $region17: #{project_head.3} parent=1 // pred_fallthru
      _
    // Predicated region
    $region18: #{project_head.3} parent=1 // pred_check
      _
    $region19: #{project_head.3} parent=1 // pred_check_branch
      %40 = sbr.rel (0) target = $region21
    $region20: #{project_head.3} parent=1 // pred_region
      %41 = dma.done [#allocation5], 2048
    $region21: #{project_head.3} parent=1 // pred_fallthru
      _
    %v43 = vld [vmem:[#allocation2] sm:$0xff]
    %v44 = vld [vmem:[#allocation2 + $0x8] sm:$0xff]
    %v45 = vpack.c.bf16 %v43, %v43
    %v46 = vpack.c.bf16 %v44, %v44
    %v47 = vld [vmem:[#allocation4] sm:$0xf]
    %v48 = vld [vmem:[#allocation4 + $0x4] sm:$0xf]
    %v49 = vld [vmem:[#allocation4 + $0x8] sm:$0xf]
    %v50 = vld [vmem:[#allocation4 + $0xc] sm:$0xf]
    %v51 = vld [vmem:[#allocation4 + $0x10] sm:$0xf]
    %v52 = vld [vmem:[#allocation4 + $0x14] sm:$0xf]
    %v53 = vld [vmem:[#allocation4 + $0x18] sm:$0xf]
    %v54 = vld [vmem:[#allocation4 + $0x1c] sm:$0xf]
    %v55 = vld [vmem:[#allocation4 + $0x20] sm:$0xf]
    %v56 = vld [vmem:[#allocation4 + $0x24] sm:$0xf]
    %v57 = vld [vmem:[#allocation4 + $0x28] sm:$0xf]
    %v58 = vld [vmem:[#allocation4 + $0x2c] sm:$0xf]
    %v59 = vld [vmem:[#allocation4 + $0x30] sm:$0xf]
    %v60 = vld [vmem:[#allocation4 + $0x34] sm:$0xf]
    %v61 = vld [vmem:[#allocation4 + $0x38] sm:$0xf]
    %v62 = vld [vmem:[#allocation4 + $0x3c] sm:$0xf]
    %v63 = vld [vmem:[#allocation4 + $0x40] sm:$0xf]
    %v64 = vld [vmem:[#allocation4 + $0x44] sm:$0xf]
    %v65 = vld [vmem:[#allocation4 + $0x48] sm:$0xf]
    %v66 = vld [vmem:[#allocation4 + $0x4c] sm:$0xf]
    %v67 = vld [vmem:[#allocation4 + $0x50] sm:$0xf]
    %v68 = vld [vmem:[#allocation4 + $0x54] sm:$0xf]
    %v69 = vld [vmem:[#allocation4 + $0x58] sm:$0xf]
    %v70 = vld [vmem:[#allocation4 + $0x5c] sm:$0xf]
    %v71 = vld [vmem:[#allocation4 + $0x60] sm:$0xf]
    %v72 = vld [vmem:[#allocation4 + $0x64] sm:$0xf]
    %v73 = vld [vmem:[#allocation4 + $0x68] sm:$0xf]
    %v74 = vld [vmem:[#allocation4 + $0x6c] sm:$0xf]
    %v75 = vld [vmem:[#allocation4 + $0x70] sm:$0xf]
    %v76 = vld [vmem:[#allocation4 + $0x74] sm:$0xf]
    %v77 = vld [vmem:[#allocation4 + $0x78] sm:$0xf]
    %v78 = vld [vmem:[#allocation4 + $0x7c] sm:$0xf]
    %v79 = vld [vmem:[%s2] sm:$0x1]
    %v81 = vlaneseq
    %v82 = vshrl.u32 %v81, 7
    %v83 = vsub.s32 0, %v82
    %v84 = vrot.slane %v79, %v83
    %v118 = vunpack.c.l.b16 %v47
    %v119 = vunpack.c.l.b16 %v48
    %v120 = vunpack.c.l.b16 %v49
    %v121 = vunpack.c.l.b16 %v50
    %v122 = vunpack.c.l.b16 %v51
    %v123 = vunpack.c.l.b16 %v52
    %v124 = vunpack.c.l.b16 %v53
    %v125 = vunpack.c.l.b16 %v54
    %v126 = vunpack.c.l.b16 %v55
    %v127 = vunpack.c.l.b16 %v56
    %v128 = vunpack.c.l.b16 %v57
    %v129 = vunpack.c.l.b16 %v58
    %v130 = vunpack.c.l.b16 %v59
    %v131 = vunpack.c.l.b16 %v60
    %v132 = vunpack.c.l.b16 %v61
    %v133 = vunpack.c.l.b16 %v62
    %v134 = vunpack.c.l.b16 %v63
    %v135 = vunpack.c.l.b16 %v64
    %v136 = vunpack.c.l.b16 %v65
    %v137 = vunpack.c.l.b16 %v66
    %v138 = vunpack.c.l.b16 %v67
    %v139 = vunpack.c.l.b16 %v68
    %v140 = vunpack.c.l.b16 %v69
    %v141 = vunpack.c.l.b16 %v70
    %v142 = vunpack.c.l.b16 %v71
    %v143 = vunpack.c.l.b16 %v72
    %v144 = vunpack.c.l.b16 %v73
    %v145 = vunpack.c.l.b16 %v74
    %v146 = vunpack.c.l.b16 %v75
    %v147 = vunpack.c.l.b16 %v76
    %v148 = vunpack.c.l.b16 %v77
    %v149 = vunpack.c.l.b16 %v78
    %v150 = vpack.c.b16 %v119, %v118
    %v151 = vpack.c.b16 %v121, %v120
    %v152 = vpack.c.b16 %v123, %v122
    %v153 = vpack.c.b16 %v125, %v124
    %v154 = vpack.c.b16 %v127, %v126
    %v155 = vpack.c.b16 %v129, %v128
    %v156 = vpack.c.b16 %v131, %v130
    %v157 = vpack.c.b16 %v133, %v132
    %v158 = vpack.c.b16 %v135, %v134
    %v159 = vpack.c.b16 %v137, %v136
    %v160 = vpack.c.b16 %v139, %v138
    %v161 = vpack.c.b16 %v141, %v140
    %v162 = vpack.c.b16 %v143, %v142
    %v163 = vpack.c.b16 %v145, %v144
    %v164 = vpack.c.b16 %v147, %v146
    %v165 = vpack.c.b16 %v149, %v148
    %182 = vmatprep.subr.bf16.mxu0 0
    %183 = vmatpush1.bf16.msra.mxu0 %v150
    %184 = vmatprep.subr.bf16.mxu0 0
    %185 = vmatpush1.bf16.msra.mxu0 %v151
    %186 = vmatprep.subr.bf16.mxu0 0
    %187 = vmatpush1.bf16.msra.mxu0 %v152
    %188 = vmatprep.subr.bf16.mxu0 0
    %189 = vmatpush1.bf16.msra.mxu0 %v153
    %190 = vmatprep.subr.bf16.mxu0 0
    %191 = vmatpush1.bf16.msra.mxu0 %v154
    %192 = vmatprep.subr.bf16.mxu0 0
    %193 = vmatpush1.bf16.msra.mxu0 %v155
    %194 = vmatprep.subr.bf16.mxu0 0
    %195 = vmatpush1.bf16.msra.mxu0 %v156
    %196 = vmatprep.subr.bf16.mxu0 0
    %197 = vmatpush1.bf16.msra.mxu0 %v157
    %198 = vmatprep.subr.bf16.mxu0 0
    %199 = vmatpush1.bf16.msra.mxu0 %v158
    %200 = vmatprep.subr.bf16.mxu0 0
    %201 = vmatpush1.bf16.msra.mxu0 %v159
    %202 = vmatprep.subr.bf16.mxu0 0
    %203 = vmatpush1.bf16.msra.mxu0 %v160
    %204 = vmatprep.subr.bf16.mxu0 0
    %205 = vmatpush1.bf16.msra.mxu0 %v161
    %206 = vmatprep.subr.bf16.mxu0 0
    %207 = vmatpush1.bf16.msra.mxu0 %v162
    %208 = vmatprep.subr.bf16.mxu0 0
    %209 = vmatpush1.bf16.msra.mxu0 %v163
    %210 = vmatprep.subr.bf16.mxu0 0
    %211 = vmatpush1.bf16.msra.mxu0 %v164
    %212 = vmatprep.subr.bf16.mxu0 0
    %213 = vmatpush1.bf16.msra.mxu0 %v165
    %214 = vmatprep.mubr.bf16.mxu0 %v46
    %215 = vmatmul.mubr.bf16.gmra.mrb[0].mxu0 %v45
    %v216 = vpop.f32.mrb[0].mxu0
    %v217 = vadd.f32 %v84, %v216
    %v218 = vpop.f32.mrb[0].mxu0
    %v219 = vpop.f32.mrb[0].mxu0
    %v220 = vpop.f32.mrb[0].mxu0
    %221 = vdwg.mxu0
    %v222 = vpack.c.bf16 %v217, %v217
    %223 = vst [vmem:[%s3] sm:$0xf] %v222
    %v224 = vrot.slane %v217, 4
    %v225 = vadd.f32 %v217, %v224
    %v226 = vrot.slane %v225, 2
    %v227 = vadd.f32 %v225, %v226
    %v228 = vrot.slane %v227, 1
    %v229 = vadd.f32 %v227, %v228
    %v230 = vmul.f32 %v217, %v217
    %v231 = vrot.slane %v230, 4
    %v232 = vadd.f32 %v230, %v231
    %v233 = vrot.slane %v232, 2
    %v234 = vadd.f32 %v232, %v233
    %v235 = vrot.slane %v234, 1
    %v236 = vadd.f32 %v234, %v235
    %vm237 = vcmask 1040384
    %v238 = vsel %vm237, %v229, %v236
    %239 = vst [vmem:[%s4] sm:$0x3] %v238
    // Predicated region
    $region22: #{project_head.3} parent=1 // pred_check
      _
    $region23: #{project_head.3} parent=1 // pred_check_branch
      %241 = sbr.rel (0) target = $region25
    $region24: #{project_head.3} parent=1 // pred_region
      _
    $region25: #{project_head.3} parent=1 // pred_fallthru
      _
    // Predicated region
    $region26: #{project_head.3} parent=1 // pred_check
      _
    $region27: #{project_head.3} parent=1 // pred_check_branch
      %243 = sbr.rel (0) target = $region29
    $region28: #{project_head.3} parent=1 // pred_region
      _
    $region29: #{project_head.3} parent=1 // pred_fallthru
      _
    // Predicated region
    $region30: #{project_head.3} parent=1 // pred_check
      _
    $region31: #{project_head.3} parent=1 // pred_check_branch
      %245 = sbr.rel (0) target = $region33
    $region32: #{project_head.3} parent=1 // pred_region
      _
    $region33: #{project_head.3} parent=1 // pred_fallthru
      _
    // Predicated region
    $region34: #{project_head.3} parent=1 // pred_check
      _
    $region35: #{project_head.3} parent=1 // pred_check_branch
      %247 = sbr.rel (0) target = $region37
    $region36: #{project_head.3} parent=1 // pred_region
      _
    $region37: #{project_head.3} parent=1 // pred_fallthru
      _
    %248 = vsyncpa [#allocation3], 1
    %249 = vsyncpa [#allocation5], 1

// kernel: project_head.5
$region0: #{project_head.5}
  #allocation0 [shape = 'u32[]', space=smem, size = 0x4, offset = 0x4, fixed_abs, tag = 'smem constant byte address 0x4 - core index']
  #allocation1 [shape = 'u32[144,128]{1,0:T(1,128)}', space=vmem, size = 0x12000, scoped, tag = 'internal scratch']
  %s0 = inlined_call_operand.vmem [shape: bf16[8,128], index: 0, kind: input, shape index: {}]
  %s1 = inlined_call_operand.vmem [shape: f32[1,128], index: 1, kind: input, shape index: {}]
  %s2 = inlined_call_operand.vmem [shape: f32[1,128], index: 2, kind: input, shape index: {}]
  %s3 = inlined_call_operand.vmem [shape: bf16[128,128], index: 3, kind: input, shape index: {}]
  %s4 = inlined_call_operand.vmem [shape: f32[1,128], index: 4, kind: input, shape index: {}]
  %s5 = inlined_call_operand.hbm [shape: f32[8,128], index: 5, kind: output, shape index: {}]
  %s6 = sld [smem:[#allocation0]]
  $region30: #{project_head.5} parent=0
    _
  %s8 = ssub.s32 1, %s6
  %s9 = scalar_select 0, %s8, %s6
  $region1: #{project_head.5} parent=0
    #allocation2 [shape = 'u8[4096]{0}', space=vmem, size = 0x1000, scoped, tag = 'output window, operand 0, single buffered']
    #allocation3 [shape = 's32[1]{0}', space=sflag, size = 0x4, scoped, tag = 'scoped memory for project_head.5']
    %10 = vsyncpa [#allocation3], 0
    // Predicated region
    $region2: #{project_head.5} parent=1 // pred_check
      _
    $region3: #{project_head.5} parent=1 // pred_check_branch
      %12 = sbr.rel (0) target = $region5
    $region4: #{project_head.5} parent=1 // pred_region
      _
    $region5: #{project_head.5} parent=1 // pred_fallthru
      _
    // Predicated region
    $region6: #{project_head.5} parent=1 // pred_check
      _
    $region7: #{project_head.5} parent=1 // pred_check_branch
      %14 = sbr.rel (0) target = $region9
    $region8: #{project_head.5} parent=1 // pred_region
      _
    $region9: #{project_head.5} parent=1 // pred_fallthru
      _
    // Predicated region
    $region10: #{project_head.5} parent=1 // pred_check
      _
    $region11: #{project_head.5} parent=1 // pred_check_branch
      %16 = sbr.rel (0) target = $region13
    $region12: #{project_head.5} parent=1 // pred_region
      _
    $region13: #{project_head.5} parent=1 // pred_fallthru
      _
    // Predicated region
    $region14: #{project_head.5} parent=1 // pred_check
      _
    $region15: #{project_head.5} parent=1 // pred_check_branch
      %18 = sbr.rel (0) target = $region17
    $region16: #{project_head.5} parent=1 // pred_region
      _
    $region17: #{project_head.5} parent=1 // pred_fallthru
      _
    // Predicated region
    $region18: #{project_head.5} parent=1 // pred_check
      _
    $region19: #{project_head.5} parent=1 // pred_check_branch
      %20 = sbr.rel (0) target = $region21
    $region20: #{project_head.5} parent=1 // pred_region
      _
    $region21: #{project_head.5} parent=1 // pred_fallthru
      _
    %v22 = vld [vmem:[%s0] sm:$0xf]
    %v23 = vunpack.c.l.bf16 %v22
    %v24 = vld [vmem:[%s1] sm:$0x1]
    %v26 = vlaneseq
    %v27 = vshrl.u32 %v26, 7
    %v28 = vsub.s32 0, %v27
    %v29 = vrot.slane %v24, %v28
    %v31 = vmul.f32 %v23, %v29
    %v32 = vld [vmem:[%s2] sm:$0x1]
    %v34 = vlaneseq
    %v35 = vshrl.u32 %v34, 7
    %v36 = vsub.s32 0, %v35
    %v37 = vrot.slane %v32, %v36
    %v39 = vadd.f32 %v31, %v37
    %v40 = vmax.f32 %v39, 0.0
    %v41 = vpack.c.bf16 %v40, %v40
    %v42 = vld [vmem:[%s3] sm:$0xf]
    %v43 = vld [vmem:[%s3 + $0x4] sm:$0xf]
    %v44 = vld [vmem:[%s3 + $0x8] sm:$0xf]
    %v45 = vld [vmem:[%s3 + $0xc] sm:$0xf]
    %v46 = vld [vmem:[%s3 + $0x10] sm:$0xf]
    %v47 = vld [vmem:[%s3 + $0x14] sm:$0xf]
    %v48 = vld [vmem:[%s3 + $0x18] sm:$0xf]
    %v49 = vld [vmem:[%s3 + $0x1c] sm:$0xf]
    %v50 = vld [vmem:[%s3 + $0x20] sm:$0xf]
    %v51 = vld [vmem:[%s3 + $0x24] sm:$0xf]
    %v52 = vld [vmem:[%s3 + $0x28] sm:$0xf]
    %v53 = vld [vmem:[%s3 + $0x2c] sm:$0xf]
    %v54 = vld [vmem:[%s3 + $0x30] sm:$0xf]
    %v55 = vld [vmem:[%s3 + $0x34] sm:$0xf]
    %v56 = vld [vmem:[%s3 + $0x38] sm:$0xf]
    %v57 = vld [vmem:[%s3 + $0x3c] sm:$0xf]
    %v58 = vld [vmem:[%s4] sm:$0x1]
    %v60 = vlaneseq
    %v61 = vshrl.u32 %v60, 7
    %v62 = vsub.s32 0, %v61
    %v63 = vrot.slane %v58, %v62
    %v81 = vunpack.c.l.b16 %v42
    %v82 = vunpack.c.l.b16 %v43
    %v83 = vunpack.c.l.b16 %v44
    %v84 = vunpack.c.l.b16 %v45
    %v85 = vunpack.c.l.b16 %v46
    %v86 = vunpack.c.l.b16 %v47
    %v87 = vunpack.c.l.b16 %v48
    %v88 = vunpack.c.l.b16 %v49
    %v89 = vunpack.c.l.b16 %v50
    %v90 = vunpack.c.l.b16 %v51
    %v91 = vunpack.c.l.b16 %v52
    %v92 = vunpack.c.l.b16 %v53
    %v93 = vunpack.c.l.b16 %v54
    %v94 = vunpack.c.l.b16 %v55
    %v95 = vunpack.c.l.b16 %v56
    %v96 = vunpack.c.l.b16 %v57
    %v97 = vpack.c.b16 %v82, %v81
    %v98 = vpack.c.b16 %v84, %v83
    %v99 = vpack.c.b16 %v86, %v85
    %v100 = vpack.c.b16 %v88, %v87
    %v101 = vpack.c.b16 %v90, %v89
    %v102 = vpack.c.b16 %v92, %v91
    %v103 = vpack.c.b16 %v94, %v93
    %v104 = vpack.c.b16 %v96, %v95
    %113 = vmatprep.subr.bf16.mxu0 0
    %114 = vmatpush1.bf16.msra.mxu0 %v97
    %115 = vmatprep.subr.bf16.mxu0 0
    %116 = vmatpush1.bf16.msra.mxu0 %v98
    %117 = vmatprep.subr.bf16.mxu0 0
    %118 = vmatpush1.bf16.msra.mxu0 %v99
    %119 = vmatprep.subr.bf16.mxu0 0
    %120 = vmatpush1.bf16.msra.mxu0 %v100
    %121 = vmatprep.subr.bf16.mxu0 0
    %122 = vmatpush1.bf16.msra.mxu0 %v101
    %123 = vmatprep.subr.bf16.mxu0 0
    %124 = vmatpush1.bf16.msra.mxu0 %v102
    %125 = vmatprep.subr.bf16.mxu0 0
    %126 = vmatpush1.bf16.msra.mxu0 %v103
    %127 = vmatprep.subr.bf16.mxu0 0
    %128 = vmatpush1.bf16.msra.mxu0 %v104
    %129 = vmatprep.subr.bf16.mxu0 0
    %130 = vmatpush1.bf16.msra.mxu0 0
    %131 = vmatprep.subr.bf16.mxu0 0
    %132 = vmatpush1.bf16.msra.mxu0 0
    %133 = vmatprep.subr.bf16.mxu0 0
    %134 = vmatpush1.bf16.msra.mxu0 0
    %135 = vmatprep.subr.bf16.mxu0 0
    %136 = vmatpush1.bf16.msra.mxu0 0
    %137 = vmatprep.subr.bf16.mxu0 0
    %138 = vmatpush1.bf16.msra.mxu0 0
    %139 = vmatprep.subr.bf16.mxu0 0
    %140 = vmatpush1.bf16.msra.mxu0 0
    %141 = vmatprep.subr.bf16.mxu0 0
    %142 = vmatpush1.bf16.msra.mxu0 0
    %143 = vmatprep.subr.bf16.mxu0 0
    %144 = vmatpush1.bf16.msra.mxu0 0
    %145 = vmatprep.mubr.bf16.mxu0 0
    %146 = vmatmul.mubr.bf16.gmra.mrb[0].mxu0 %v41
    %v147 = vpop.f32.mrb[0].mxu0
    %v148 = vadd.f32 %v63, %v147
    %v149 = vpop.f32.mrb[0].mxu0
    %v150 = vpop.f32.mrb[0].mxu0
    %v151 = vpop.f32.mrb[0].mxu0
    %152 = vdwg.mxu0
    %v153 = vmul.f32 %v148, %v148
    %154 = vadd.xlane.f32.xlu0 %v153
    %v155 = vpop.xlane.xlu0 %154
    %v156 = vmax.f32 %v155, 1e-24
    %v157 = vrsqrt.pop %v156
    %v158 = vmul.f32 %v148, %v157
    %159 = vst [vmem:[#allocation2] sm:$0xff] %v158
    // Predicated region
    $region22: #{project_head.5} parent=1 // pred_check
      _
    $region23: #{project_head.5} parent=1 // pred_check_branch
      %161 = sbr.rel (0) target = $region25
    $region24: #{project_head.5} parent=1 // pred_region
      %s163 = ssub.s32 128, 128
      %164 = vsyncadd [#allocation3], %s163
      %s166 = sshll.u32 [#allocation2], 4
      %s167 = int_to_ptr.vmem [resolvable:$true] %s166
      %169 = dma.vmem_to_hbm [thread:$0]  %s167, 128, %s5, [#allocation3]
    $region25: #{project_head.5} parent=1 // pred_fallthru
      _
    // Predicated region
    $region26: #{project_head.5} parent=1 // pred_check
      _
    $region27: #{project_head.5} parent=1 // pred_check_branch
      %171 = sbr.rel (0) target = $region29
    $region28: #{project_head.5} parent=1 // pred_region
      %172 = dma.done [#allocation3], 128
    $region29: #{project_head.5} parent=1 // pred_fallthru
      _
    %173 = vsyncpa [#allocation3], 1

</llo_original>
